<compile_context>
chip_gen: v7x
topology: tpu7x:2x2x1
jax: 0.10.0
libtpu: 0.0.40
codegen_flags: <defaults>
</compile_context>

<pallas_src>
import jax
import jax.numpy as jnp
import numpy as np
from jax.experimental import pallas as pl
from jax.experimental.pallas import tpu as pltpu

NEG_SLOPE = 0.2
NEG_BIG = -1e30
EPSILON = 1e-12


def _round_up(x, m):
    return ((x + m - 1) // m) * m


def simple_hgn_kernel(x_head_ref, w_al_ref, w_res_ref, b_res_ref,
                      bias_ref, h_tail_ref, out_ref,
                      m_scr, l_scr, acc_scr):
    """One (head-tile, tail-tile) grid step.

    x_head_ref : [TH, F]   head node features (constant over the tail axis)
    w_al_ref   : [F, 1]    fused attention projection  W @ a_l^T
    w_res_ref  : [F, C]    node_residual Linear weight (transposed)
    b_res_ref  : [1, C]    node_residual Linear bias
    bias_ref   : [TH, TN]  merged stream: sr[j] + h_e[type(i,j)] on edges,
                           NEG_BIG on non-edges (possibly bf16)
    h_tail_ref : [TN, C]   precomputed tail projection x_tail @ W (tail tile)
    out_ref    : [TH, C]   final per-node class distribution
    m_scr/l_scr: [TH, 1]   online-softmax running max / sum
    acc_scr    : [TH, C]   online-softmax running (unnormalised) aggregation
    """
    k = pl.program_id(1)

    @pl.when(k == 0)
    def _init():
        m_scr[...] = jnp.full_like(m_scr, -jnp.inf)
        l_scr[...] = jnp.zeros_like(l_scr)
        acc_scr[...] = jnp.zeros_like(acc_scr)

    x_head = x_head_ref[...]
    bias = bias_ref[...].astype(jnp.float32)     # upcast right after load

    # Attention logits: per-head scalar sl plus the merged (sr + h_e) bias.
    sl = jnp.dot(x_head, w_al_ref[...], preferred_element_type=jnp.float32)
    s = sl + bias
    s = jnp.where(s >= 0.0, s, NEG_SLOPE * s)    # LeakyReLU(0.2)
    edge = bias > 0.5 * NEG_BIG                  # recover sparsity mask
    s = jnp.where(edge, s, NEG_BIG)

    # Online (flash-style) masked softmax accumulation over tail tiles.
    m_prev = m_scr[...]
    m_new = jnp.maximum(m_prev, jnp.max(s, axis=-1, keepdims=True))
    alpha = jnp.exp(m_prev - m_new)
    p = jnp.where(edge, jnp.exp(s - m_new), 0.0)
    l_scr[...] = alpha * l_scr[...] + jnp.sum(p, axis=-1, keepdims=True)
    acc_scr[...] = alpha * acc_scr[...] + jnp.dot(
        p, h_tail_ref[...], preferred_element_type=jnp.float32)
    m_scr[...] = m_new

    @pl.when(k == pl.num_programs(1) - 1)
    def _finish():
        # Deferred softmax normalisation on the [TH, C] result (not [TH, NT]).
        inv_l = pl.reciprocal(jnp.maximum(l_scr[...], 1e-30), approx=True)
        agg = acc_scr[...] * inv_l               # rows with no edges stay 0
        res = jnp.dot(x_head, w_res_ref[...],
                      preferred_element_type=jnp.float32) + b_res_ref[...]
        out = agg + res
        # Row-wise L2 normalisation clamped at epsilon.
        nrm = jnp.sqrt(jnp.sum(out * out, axis=-1, keepdims=True))
        out = out / jnp.maximum(nrm, EPSILON)
        # Final class softmax (single-label task).
        mx = jnp.max(out, axis=-1, keepdims=True)
        ex = jnp.exp(out - mx)
        out_ref[...] = ex / jnp.sum(ex, axis=-1, keepdims=True)


def simple_hgn_forward(x_head, w_al, w_res, b_res, bias, h_tail,
                       *, tile_h=128, tile_nt=512,
                       bias_dtype=jnp.bfloat16,
                       vmem_limit_bytes=64 * 1024 * 1024):
    """Pallas launch: pads head / tail counts, tiles the [N_head, N_tail]
    bias stream and runs the online-softmax aggregation kernel.

    tile_h   : 128 fills the v5e MXU height; use 256 on v6e / v7x.
    tile_nt  : tail-tile width; VMEM scales as tile_h * tile_nt so the same
               code stays under v7x's 64 MiB VMEM for large graphs.
    bias_dtype: bf16 halves the dominant HBM stream (upcast in-kernel);
               float32 gives bit-exact parity with a full-f32 reference.
    """
    n_head, feat = x_head.shape
    n_tail, n_cls = h_tail.shape

    tile_h = _round_up(min(tile_h, _round_up(n_head, 8)), 8)
    tile_nt = _round_up(min(tile_nt, _round_up(n_tail, 128)), 128)
    nh_pad = _round_up(n_head, tile_h)
    nt_pad = _round_up(n_tail, tile_nt)

    x_head_p = jnp.zeros((nh_pad, feat), jnp.float32).at[:n_head].set(x_head)
    h_tail_p = jnp.zeros((nt_pad, n_cls), jnp.float32).at[:n_tail].set(h_tail)
    bias_p = jnp.full((nh_pad, nt_pad), NEG_BIG, jnp.float32)
    bias_p = bias_p.at[:n_head, :n_tail].set(bias).astype(bias_dtype)

    grid = (nh_pad // tile_h, nt_pad // tile_nt)
    grid_spec = pltpu.PrefetchScalarGridSpec(
        num_scalar_prefetch=0,
        grid=grid,
        in_specs=[
            pl.BlockSpec((tile_h, feat), lambda i, k: (i, 0)),     # x_head tile
            pl.BlockSpec((feat, 1), lambda i, k: (0, 0)),          # w_al
            pl.BlockSpec((feat, n_cls), lambda i, k: (0, 0)),      # W_res
            pl.BlockSpec((1, n_cls), lambda i, k: (0, 0)),         # b_res
            pl.BlockSpec((tile_h, tile_nt), lambda i, k: (i, k)),  # bias tile
            pl.BlockSpec((tile_nt, n_cls), lambda i, k: (k, 0)),   # h_tail tile
        ],
        out_specs=pl.BlockSpec((tile_h, n_cls), lambda i, k: (i, 0)),
        scratch_shapes=[
            pltpu.VMEM((tile_h, 1), jnp.float32),       # running max m
            pltpu.VMEM((tile_h, 1), jnp.float32),       # running sum l
            pltpu.VMEM((tile_h, n_cls), jnp.float32),   # running aggregation
        ],
    )
    out = pl.pallas_call(
        simple_hgn_kernel,
        out_shape=jax.ShapeDtypeStruct((nh_pad, n_cls), jnp.float32),
        grid_spec=grid_spec,
        compiler_params=pltpu.CompilerParams(
            dimension_semantics=("parallel", "arbitrary"),
            vmem_limit_bytes=vmem_limit_bytes),
    )(x_head_p, w_al, w_res, b_res, bias_p, h_tail_p)
    return out[:n_head]


def prepare_inputs(x_tail, W, a_l, a_r, W_e, a_e, edge_emb,
                   head_ind, tail_ind, edge_type, n_head):
    """Grid-invariant precompute (plain JAX, O(N*F*C) once):
       * h_tail = x_tail @ W (hoisted out of the grid)
       * w_al   = W @ a_l^T  (fused a_l projection; h_head never materialised)
       * merged bias[i,j] = sr[j] + h_e[type(i,j)] on edges, NEG_BIG elsewhere,
         with sr = h_tail @ a_r^T — one dense stream replacing mask + h_e.
    """
    h_tail = x_tail @ W                                    # [NT, C]
    sr = h_tail @ a_r.T                                    # [NT, 1]
    w_al = W @ a_l.T                                       # [F, 1]
    h_e_type = jnp.sum(a_e * (edge_emb @ W_e), axis=-1)    # [num_edge_types]
    n_tail = x_tail.shape[0]
    bias = jnp.full((n_head, n_tail), NEG_BIG, jnp.float32)
    bias = bias.at[head_ind, tail_ind].set(
        h_e_type[edge_type] + sr[tail_ind, 0])
    return w_al, h_tail, bias


def reference_raw(x_head, x_tail, W, a_l, a_r, W_e, a_e, edge_emb,
                  w_res, b_res, head_ind, tail_ind, edge_type):
    """Independent plain-JAX f32 emulation of the PyTorch module."""
    h_head = x_head @ W
    h_tail = x_tail @ W
    h_l = jnp.sum(a_l * h_head, axis=-1)
    h_r = jnp.sum(a_r * h_tail, axis=-1)
    h_e_type = jnp.sum(a_e * (edge_emb @ W_e), axis=-1)
    nh, nt = x_head.shape[0], x_tail.shape[0]
    mask = jnp.zeros((nh, nt), jnp.float32).at[head_ind, tail_ind].set(1.0)
    he = jnp.zeros((nh, nt), jnp.float32).at[head_ind, tail_ind].set(
        h_e_type[edge_type])
    s = h_l[:, None] + h_r[None, :] + he
    s = jnp.where(s >= 0, s, NEG_SLOPE * s)
    s = jnp.where(mask > 0, s, NEG_BIG)
    m = jnp.max(s, axis=-1, keepdims=True)
    p = jnp.exp(s - m) * mask
    d = jnp.sum(p, axis=-1, keepdims=True)
    p = jnp.where(d > 0, p / jnp.maximum(d, 1e-30), 0.0)
    out = p @ h_tail + x_head @ w_res + b_res
    nrm = jnp.sqrt(jnp.sum(out * out, axis=-1, keepdims=True))
    out = out / jnp.maximum(nrm, EPSILON)
    return jax.nn.softmax(out, axis=-1)


def reference_dense(x_head, w_al, w_res, b_res, bias, h_tail):
    """Same math as the kernel, from the preprocessed operands (for matched
    checks when the bias stream is quantised to bf16)."""
    sl = x_head @ w_al
    s = sl + bias
    s = jnp.where(s >= 0, s, NEG_SLOPE * s)
    edge = bias > 0.5 * NEG_BIG
    s = jnp.where(edge, s, NEG_BIG)
    m = jnp.max(s, axis=-1, keepdims=True)
    p = jnp.where(edge, jnp.exp(s - m), 0.0)
    d = jnp.sum(p, axis=-1, keepdims=True)
    agg = (p @ h_tail) / jnp.maximum(d, 1e-30)
    out = agg + x_head @ w_res + b_res
    nrm = jnp.sqrt(jnp.sum(out * out, axis=-1, keepdims=True))
    out = out / jnp.maximum(nrm, EPSILON)
    return jax.nn.softmax(out, axis=-1)


def _uniform(key, shape, fan_sum):
    stdv = float(np.sqrt(6.0 / fan_sum))
    return jax.random.uniform(key, shape, jnp.float32, -stdv, stdv)


if __name__ == "__main__":
    # SimpleHGN_final config: edge_GAT = SimpleHGNLayer(in=GAT_hid_len*nhead,
    # out=class_num, nhead=1, node_residual=True), single-label task.
    GAT_hid_len, head_num = 16, 2
    F = GAT_hid_len * head_num          # in_features_len = 32
    C = 8                               # class_num (> 2 -> keep full softmax)
    EDGE_FEATS = 8
    NUM_ETYPES = 3
    NH = 40                             # head nodes of the target type
    NT_PER = 48                         # tail nodes per edge type
    NT = NUM_ETYPES * NT_PER            # 144 concatenated tail nodes

    key = jax.random.PRNGKey(0)
    ks = jax.random.split(key, 10)
    W = _uniform(ks[0], (F, C), F + C)
    W_e = _uniform(ks[1], (EDGE_FEATS, EDGE_FEATS), 2 * EDGE_FEATS)
    a_l = _uniform(ks[2], (1, C), 1 + C)            # nhead = 1, squeezed
    a_r = _uniform(ks[3], (1, C), 1 + C)
    a_e = _uniform(ks[4], (1, EDGE_FEATS), 1 + EDGE_FEATS)
    edge_emb = _uniform(ks[5], (NUM_ETYPES, EDGE_FEATS), NUM_ETYPES + EDGE_FEATS)
    W_res = _uniform(ks[6], (F, C), F + C)          # Linear weight (transposed)
    b_res = _uniform(ks[7], (1, C), F + C)
    x_head = jax.random.normal(ks[8], (NH, F), jnp.float32)
    x_tail = jax.random.normal(ks[9], (NT, F), jnp.float32)

    # Synthetic heterogeneous graph: 3 edge types, 2 edges per (type, head).
    head_ind, tail_ind, etype = [], [], []
    for t in range(NUM_ETYPES):
        for i in range(NH):
            for off in (0, 5):
                head_ind.append(i)
                tail_ind.append(t * NT_PER + (3 * i + off + t) % NT_PER)
                etype.append(t)
    head_ind = jnp.asarray(head_ind, jnp.int32)
    tail_ind = jnp.asarray(tail_ind, jnp.int32)
    etype = jnp.asarray(etype, jnp.int32)

    # --- shared precompute (hoisted, grid-invariant) ---
    w_al, h_tail, bias = prepare_inputs(x_tail, W, a_l, a_r, W_e, a_e,
                                        edge_emb, head_ind, tail_ind, etype, NH)

    ref = reference_raw(x_head, x_tail, W, a_l, a_r, W_e, a_e, edge_emb,
                        W_res, b_res, head_ind, tail_ind, etype)

    # Run 1: f32 bias stream, production-style tiles (single grid step here);
    # tight check against the independent full-f32 reference.
    out32 = jax.block_until_ready(
        simple_hgn_forward(x_head, w_al, W_res, b_res, bias, h_tail,
                           tile_h=128, tile_nt=512, bias_dtype=jnp.float32))
    np.testing.assert_allclose(np.asarray(out32), np.asarray(ref),
                               rtol=5e-3, atol=1e-3)

    # Run 2: bf16 bias stream + deliberately small tiles so the multi-step grid
    # (3 head tiles x 2 tail tiles), the online-softmax accumulation and the
    # head/tail padding paths are all exercised; checked against a reference
    # fed the identically quantised bias.
    out16 = jax.block_until_ready(
        simple_hgn_forward(x_head, w_al, W_res, b_res, bias, h_tail,
                           tile_h=16, tile_nt=128, bias_dtype=jnp.bfloat16))
    ref16 = reference_dense(x_head, w_al, W_res, b_res,
                            bias.astype(jnp.bfloat16).astype(jnp.float32),
                            h_tail)
    np.testing.assert_allclose(np.asarray(out16), np.asarray(ref16),
                               rtol=5e-3, atol=1e-3)

    # class_num <= 2 path of SimpleHGN_final (not taken here since C = 8).
    final = out32[:, 0] if C <= 2 else out32
    # TODO(synk): the 'multi-label' task_type uses sigmoid instead of the final
    # softmax; only the 'single-label' path is implemented in the kernel.

    print("KERNEL_OK")
</pallas_src>

<mosaic_0001>
module attributes {stable_mosaic.version = 11 : i64} {
  func.func @simple_hgn_kernel(%arg0: i32, %arg1: i32, %arg2: memref<40x32xf32, #tpu.memory_space<vmem>>, %arg3: memref<32x1xf32, #tpu.memory_space<vmem>>, %arg4: memref<32x8xf32, #tpu.memory_space<vmem>>, %arg5: memref<1x8xf32, #tpu.memory_space<vmem>>, %arg6: memref<40x256xf32, #tpu.memory_space<vmem>>, %arg7: memref<256x8xf32, #tpu.memory_space<vmem>>, %arg8: memref<40x8xf32, #tpu.memory_space<vmem>>, %arg9: memref<40x1xf32, #tpu.memory_space<vmem>>, %arg10: memref<40x1xf32, #tpu.memory_space<vmem>>, %arg11: memref<40x8xf32, #tpu.memory_space<vmem>>) attributes {dimension_semantics = [#tpu.dimension_semantics<parallel>, #tpu.dimension_semantics<arbitrary>], iteration_bounds = array<i64: 1, 1>, scalar_prefetch = 0 : i64, scratch_operands = 3 : i64, tpu.core_type = #tpu.core_type<tc>, window_params = [{transform_indices = @transform_0, window_bounds = array<i64: 40, 32>}, {pipeline_mode = #tpu.pipeline_mode<synchronous>, transform_indices = @transform_1, window_bounds = array<i64: 32, 1>}, {pipeline_mode = #tpu.pipeline_mode<synchronous>, transform_indices = @transform_2, window_bounds = array<i64: 32, 8>}, {pipeline_mode = #tpu.pipeline_mode<synchronous>, transform_indices = @transform_3, window_bounds = array<i64: 1, 8>}, {transform_indices = @transform_4, window_bounds = array<i64: 40, 256>}, {transform_indices = @transform_5, window_bounds = array<i64: 256, 8>}, {transform_indices = @transform_6, window_bounds = array<i64: 40, 8>}]} {
    %c0_i32 = arith.constant 0 : i32
    %0 = arith.cmpi eq, %arg1, %c0_i32 : i32
    %1 = arith.extui %0 : i1 to i32
    %c0_i32_0 = arith.constant 0 : i32
    %2 = arith.cmpi ne, %1, %c0_i32_0 : i32
    scf.if %2 {
      %cst_30 = arith.constant 0xFF800000 : f32
      %46 = vector.broadcast %cst_30 : f32 to vector<40x1xf32>
      %c0_31 = arith.constant 0 : index
      %c0_32 = arith.constant 0 : index
      %47 = vector.load %arg9[%c0_31, %c0_32] : memref<40x1xf32, #tpu.memory_space<vmem>>, vector<40x1xf32>
      tpu.vector_store %arg9[%c0_31, %c0_32], %46 {strides = array<i32>} : memref<40x1xf32, #tpu.memory_space<vmem>>, vector<40x1xf32>,
      %cst_33 = arith.constant 0.000000e+00 : f32
      %48 = vector.broadcast %cst_33 : f32 to vector<40x1xf32>
      %c0_34 = arith.constant 0 : index
      %c0_35 = arith.constant 0 : index
      %49 = vector.load %arg10[%c0_34, %c0_35] : memref<40x1xf32, #tpu.memory_space<vmem>>, vector<40x1xf32>
      tpu.vector_store %arg10[%c0_34, %c0_35], %48 {strides = array<i32>} : memref<40x1xf32, #tpu.memory_space<vmem>>, vector<40x1xf32>,
      %cst_36 = arith.constant 0.000000e+00 : f32
      %50 = vector.broadcast %cst_36 : f32 to vector<40x8xf32>
      %c0_37 = arith.constant 0 : index
      %c0_38 = arith.constant 0 : index
      %51 = vector.load %arg11[%c0_37, %c0_38] : memref<40x8xf32, #tpu.memory_space<vmem>>, vector<40x8xf32>
      tpu.vector_store %arg11[%c0_37, %c0_38], %50 {strides = array<i32>} : memref<40x8xf32, #tpu.memory_space<vmem>>, vector<40x8xf32>,
    } else {
    }
    %c0 = arith.constant 0 : index
    %c0_1 = arith.constant 0 : index
    %3 = vector.load %arg2[%c0, %c0_1] : memref<40x32xf32, #tpu.memory_space<vmem>>, vector<40x32xf32>
    %c0_2 = arith.constant 0 : index
    %c0_3 = arith.constant 0 : index
    %4 = vector.load %arg6[%c0_2, %c0_3] : memref<40x256xf32, #tpu.memory_space<vmem>>, vector<40x256xf32>
    %c0_4 = arith.constant 0 : index
    %c0_5 = arith.constant 0 : index
    %5 = vector.load %arg3[%c0_4, %c0_5] : memref<32x1xf32, #tpu.memory_space<vmem>>, vector<32x1xf32>
    %cst = arith.constant dense<0.000000e+00> : vector<40x1xf32>
    %6 = tpu.matmul %3, %5, %cst {dimension_numbers = #tpu.dot_dimension_numbers<[1], [0], [0], [1], [0, 0, 1, 1], [], []>} : vector<40x32xf32>, vector<32x1xf32>, vector<40x1xf32> -> vector<40x1xf32>
    %7 = vector.broadcast %6 : vector<40x1xf32> to vector<40x256xf32>
    %8 = arith.addf %7, %4 : vector<40x256xf32>
    %cst_6 = arith.constant 0.000000e+00 : f32
    %9 = vector.broadcast %cst_6 : f32 to vector<40x256xf32>
    %10 = arith.cmpf oge, %8, %9 : vector<40x256xf32>
    %cst_7 = arith.constant 2.000000e-01 : f32
    %11 = vector.broadcast %cst_7 : f32 to vector<40x256xf32>
    %12 = arith.mulf %11, %8 : vector<40x256xf32>
    %13 = arith.select %10, %8, %12 : vector<40x256xi1>, vector<40x256xf32>
    %cst_8 = arith.constant -5.000000e+29 : f32
    %14 = vector.broadcast %cst_8 : f32 to vector<40x256xf32>
    %15 = arith.cmpf ogt, %4, %14 : vector<40x256xf32>
    %cst_9 = arith.constant -1.000000e+30 : f32
    %16 = vector.broadcast %cst_9 : f32 to vector<40x256xf32>
    %17 = arith.select %15, %13, %16 : vector<40x256xi1>, vector<40x256xf32>
    %c0_10 = arith.constant 0 : index
    %c0_11 = arith.constant 0 : index
    %18 = vector.load %arg9[%c0_10, %c0_11] : memref<40x1xf32, #tpu.memory_space<vmem>>, vector<40x1xf32>
    %cst_12 = arith.constant dense<0xFF800000> : vector<40xf32>
    %19 = vector.multi_reduction <maximumf>, %17, %cst_12 [1] : vector<40x256xf32> to vector<40xf32>
    %20 = vector.shape_cast %19 : vector<40xf32> to vector<40x1xf32>
    %21 = arith.maximumf %18, %20 : vector<40x1xf32>
    %22 = arith.subf %18, %21 : vector<40x1xf32>
    %23 = math.exp %22 : vector<40x1xf32>
    %24 = vector.broadcast %21 : vector<40x1xf32> to vector<40x256xf32>
    %25 = arith.subf %17, %24 : vector<40x256xf32>
    %26 = math.exp %25 : vector<40x256xf32>
    %cst_13 = arith.constant 0.000000e+00 : f32
    %27 = vector.broadcast %cst_13 : f32 to vector<40x256xf32>
    %28 = arith.select %15, %26, %27 : vector<40x256xi1>, vector<40x256xf32>
    %c0_14 = arith.constant 0 : index
    %c0_15 = arith.constant 0 : index
    %29 = vector.load %arg10[%c0_14, %c0_15] : memref<40x1xf32, #tpu.memory_space<vmem>>, vector<40x1xf32>
    %30 = arith.mulf %23, %29 : vector<40x1xf32>
    %cst_16 = arith.constant dense<0.000000e+00> : vector<40xf32>
    %31 = vector.multi_reduction <add>, %28, %cst_16 [1] : vector<40x256xf32> to vector<40xf32>
    %32 = vector.shape_cast %31 : vector<40xf32> to vector<40x1xf32>
    %33 = arith.addf %30, %32 : vector<40x1xf32>
    %c0_17 = arith.constant 0 : index
    %c0_18 = arith.constant 0 : index
    %34 = vector.load %arg10[%c0_17, %c0_18] : memref<40x1xf32, #tpu.memory_space<vmem>>, vector<40x1xf32>
    tpu.vector_store %arg10[%c0_17, %c0_18], %33 {strides = array<i32>} : memref<40x1xf32, #tpu.memory_space<vmem>>, vector<40x1xf32>,
    %c0_19 = arith.constant 0 : index
    %c0_20 = arith.constant 0 : index
    %35 = vector.load %arg11[%c0_19, %c0_20] : memref<40x8xf32, #tpu.memory_space<vmem>>, vector<40x8xf32>
    %36 = vector.broadcast %23 : vector<40x1xf32> to vector<40x8xf32>
    %37 = arith.mulf %36, %35 : vector<40x8xf32>
    %c0_21 = arith.constant 0 : index
    %c0_22 = arith.constant 0 : index
    %38 = vector.load %arg7[%c0_21, %c0_22] : memref<256x8xf32, #tpu.memory_space<vmem>>, vector<256x8xf32>
    %cst_23 = arith.constant dense<0.000000e+00> : vector<40x8xf32>
    %39 = tpu.matmul %28, %38, %cst_23 {dimension_numbers = #tpu.dot_dimension_numbers<[1], [0], [0], [1], [0, 0, 1, 1], [], []>} : vector<40x256xf32>, vector<256x8xf32>, vector<40x8xf32> -> vector<40x8xf32>
    %40 = arith.addf %37, %39 : vector<40x8xf32>
    %c0_24 = arith.constant 0 : index
    %c0_25 = arith.constant 0 : index
    %41 = vector.load %arg11[%c0_24, %c0_25] : memref<40x8xf32, #tpu.memory_space<vmem>>, vector<40x8xf32>
    tpu.vector_store %arg11[%c0_24, %c0_25], %40 {strides = array<i32>} : memref<40x8xf32, #tpu.memory_space<vmem>>, vector<40x8xf32>,
    %c0_26 = arith.constant 0 : index
    %c0_27 = arith.constant 0 : index
    %42 = vector.load %arg9[%c0_26, %c0_27] : memref<40x1xf32, #tpu.memory_space<vmem>>, vector<40x1xf32>
    tpu.vector_store %arg9[%c0_26, %c0_27], %21 {strides = array<i32>} : memref<40x1xf32, #tpu.memory_space<vmem>>, vector<40x1xf32>,
    %c0_i32_28 = arith.constant 0 : i32
    %43 = arith.cmpi eq, %arg1, %c0_i32_28 : i32
    %44 = arith.extui %43 : i1 to i32
    %c0_i32_29 = arith.constant 0 : i32
    %45 = arith.cmpi ne, %44, %c0_i32_29 : i32
    scf.if %45 {
      %c0_30 = arith.constant 0 : index
      %c0_31 = arith.constant 0 : index
      %46 = vector.load %arg10[%c0_30, %c0_31] : memref<40x1xf32, #tpu.memory_space<vmem>>, vector<40x1xf32>
      %cst_32 = arith.constant 1.000000e-30 : f32
      %47 = vector.broadcast %cst_32 : f32 to vector<40x1xf32>
      %48 = arith.maximumf %46, %47 : vector<40x1xf32>
      %49 = tpu.reciprocal %48 {approx = true} : vector<40x1xf32> -> vector<40x1xf32>
      %c0_33 = arith.constant 0 : index
      %c0_34 = arith.constant 0 : index
      %50 = vector.load %arg11[%c0_33, %c0_34] : memref<40x8xf32, #tpu.memory_space<vmem>>, vector<40x8xf32>
      %51 = vector.broadcast %49 : vector<40x1xf32> to vector<40x8xf32>
      %52 = arith.mulf %50, %51 : vector<40x8xf32>
      %c0_35 = arith.constant 0 : index
      %c0_36 = arith.constant 0 : index
      %53 = vector.load %arg4[%c0_35, %c0_36] : memref<32x8xf32, #tpu.memory_space<vmem>>, vector<32x8xf32>
      %cst_37 = arith.constant dense<0.000000e+00> : vector<40x8xf32>
      %54 = tpu.matmul %3, %53, %cst_37 {dimension_numbers = #tpu.dot_dimension_numbers<[1], [0], [0], [1], [0, 0, 1, 1], [], []>} : vector<40x32xf32>, vector<32x8xf32>, vector<40x8xf32> -> vector<40x8xf32>
      %c0_38 = arith.constant 0 : index
      %c0_39 = arith.constant 0 : index
      %55 = vector.load %arg5[%c0_38, %c0_39] : memref<1x8xf32, #tpu.memory_space<vmem>>, vector<1x8xf32>
      %56 = vector.broadcast %55 : vector<1x8xf32> to vector<40x8xf32>
      %57 = arith.addf %54, %56 : vector<40x8xf32>
      %58 = arith.addf %52, %57 : vector<40x8xf32>
      %59 = arith.mulf %58, %58 : vector<40x8xf32>
      %cst_40 = arith.constant dense<0.000000e+00> : vector<40xf32>
      %60 = vector.multi_reduction <add>, %59, %cst_40 [1] : vector<40x8xf32> to vector<40xf32>
      %61 = vector.shape_cast %60 : vector<40xf32> to vector<40x1xf32>
      %62 = math.sqrt %61 : vector<40x1xf32>
      %cst_41 = arith.constant 9.99999996E-13 : f32
      %63 = vector.broadcast %cst_41 : f32 to vector<40x1xf32>
      %64 = arith.maximumf %62, %63 : vector<40x1xf32>
      %65 = vector.broadcast %64 : vector<40x1xf32> to vector<40x8xf32>
      %66 = arith.divf %58, %65 : vector<40x8xf32>
      %cst_42 = arith.constant dense<0xFF800000> : vector<40xf32>
      %67 = vector.multi_reduction <maximumf>, %66, %cst_42 [1] : vector<40x8xf32> to vector<40xf32>
      %68 = vector.shape_cast %67 : vector<40xf32> to vector<40x1xf32>
      %69 = vector.broadcast %68 : vector<40x1xf32> to vector<40x8xf32>
      %70 = arith.subf %66, %69 : vector<40x8xf32>
      %71 = math.exp %70 : vector<40x8xf32>
      %cst_43 = arith.constant dense<0.000000e+00> : vector<40xf32>
      %72 = vector.multi_reduction <add>, %71, %cst_43 [1] : vector<40x8xf32> to vector<40xf32>
      %73 = vector.shape_cast %72 : vector<40xf32> to vector<40x1xf32>
      %74 = vector.broadcast %73 : vector<40x1xf32> to vector<40x8xf32>
      %75 = arith.divf %71, %74 : vector<40x8xf32>
      %c0_44 = arith.constant 0 : index
      %c0_45 = arith.constant 0 : index
      %76 = vector.load %arg8[%c0_44, %c0_45] : memref<40x8xf32, #tpu.memory_space<vmem>>, vector<40x8xf32>
      tpu.vector_store %arg8[%c0_44, %c0_45], %75 {strides = array<i32>} : memref<40x8xf32, #tpu.memory_space<vmem>>, vector<40x8xf32>,
    } else {
    }
    return
  }
  func.func @transform_0(%arg0: i32, %arg1: i32) -> (i32, i32) {
    %c0_i32 = arith.constant 0 : i32
    %c0_i32_0 = arith.constant 0 : i32
    return %arg0, %c0_i32 : i32, i32
  }
  func.func @transform_1(%arg0: i32, %arg1: i32) -> (i32, i32) {
    %c0_i32 = arith.constant 0 : i32
    %c0_i32_0 = arith.constant 0 : i32
    %c0_i32_1 = arith.constant 0 : i32
    return %c0_i32, %c0_i32_0 : i32, i32
  }
  func.func @transform_2(%arg0: i32, %arg1: i32) -> (i32, i32) {
    %c0_i32 = arith.constant 0 : i32
    %c0_i32_0 = arith.constant 0 : i32
    %c0_i32_1 = arith.constant 0 : i32
    return %c0_i32, %c0_i32_0 : i32, i32
  }
  func.func @transform_3(%arg0: i32, %arg1: i32) -> (i32, i32) {
    %c0_i32 = arith.constant 0 : i32
    %c0_i32_0 = arith.constant 0 : i32
    %c0_i32_1 = arith.constant 0 : i32
    return %c0_i32, %c0_i32_0 : i32, i32
  }
  func.func @transform_4(%arg0: i32, %arg1: i32) -> (i32, i32) {
    %c0_i32 = arith.constant 0 : i32
    return %arg0, %arg1 : i32, i32
  }
  func.func @transform_5(%arg0: i32, %arg1: i32) -> (i32, i32) {
    %c0_i32 = arith.constant 0 : i32
    %c0_i32_0 = arith.constant 0 : i32
    return %arg1, %c0_i32 : i32, i32
  }
  func.func @transform_6(%arg0: i32, %arg1: i32) -> (i32, i32) {
    %c0_i32 = arith.constant 0 : i32
    %c0_i32_0 = arith.constant 0 : i32
    return %arg0, %c0_i32 : i32, i32
  }
}

</mosaic_0001>

<llo_original>
// kernel: tpu_custom_call.1
$region0: #{tpu_custom_call.1}
  #allocation0 [shape = 'u32[]', space=smem, size = 0x4, offset = 0x4, fixed_abs, tag = 'smem constant byte address 0x4 - core index']
  #allocation1 [shape = 'u32[144,128]{1,0:T(1,128)}', space=vmem, size = 0x12000, scoped, tag = 'internal scratch']
  #allocation2 [shape = 'f32[40,1]{1,0:T(8,128)}', space=vmem, size = 0x5000, scoped, tag = 'scratch operand']
  #allocation3 [shape = 'f32[40,1]{1,0:T(8,128)}', space=vmem, size = 0x5000, scoped, tag = 'scratch operand']
  #allocation4 [shape = 'f32[40,8]{1,0:T(8,128)}', space=vmem, size = 0x5000, scoped, tag = 'scratch operand']
  %s0 = inlined_call_operand.hbm [shape: f32[40,32], index: 0, kind: input, shape index: {}]
  %s1 = inlined_call_operand.hbm [shape: f32[32,1], index: 1, kind: input, shape index: {}]
  %s2 = inlined_call_operand.hbm [shape: f32[32,8], index: 2, kind: input, shape index: {}]
  %s3 = inlined_call_operand.hbm [shape: f32[1,8], index: 3, kind: input, shape index: {}]
  %s4 = inlined_call_operand.hbm [shape: f32[40,256], index: 4, kind: input, shape index: {}]
  %s5 = inlined_call_operand.hbm [shape: f32[256,8], index: 5, kind: input, shape index: {}]
  %s6 = inlined_call_operand.hbm [shape: f32[40,8], index: 6, kind: output, shape index: {}]
  %s7 = sld [smem:[#allocation0]]
  $region66: #{tpu_custom_call.1} parent=0
    _
  %s9 = ssub.s32 1, %s7
  %s10 = scalar_select 0, %s9, %s7
  $region1: #{tpu_custom_call.1} parent=0
    #allocation5 [shape = 'u8[20480]{0}', space=vmem, size = 0x5000, scoped, tag = 'input window, operand 0, single buffered']
    #allocation6 [shape = 's32[1]{0}', space=sflag, size = 0x4, scoped, tag = 'scoped memory for tpu_custom_call.1']
    #allocation7 [shape = 's32[1]{0}', space=sflag, size = 0x4, scoped, tag = 'scoped memory for tpu_custom_call.1']
    #allocation8 [shape = 'u8[16384]{0}', space=vmem, size = 0x4000, scoped, tag = 'input window, operand 1, single buffered']
    #allocation9 [shape = 's32[1]{0}', space=sflag, size = 0x4, scoped, tag = 'scoped memory for tpu_custom_call.1']
    #allocation10 [shape = 'u8[16384]{0}', space=vmem, size = 0x4000, scoped, tag = 'input window, operand 2, single buffered']
    #allocation11 [shape = 'u8[512]{0}', space=vmem, size = 0x400, scoped, tag = 'input window, operand 3, single buffered']
    #allocation12 [shape = 's32[1]{0}', space=sflag, size = 0x4, scoped, tag = 'scoped memory for tpu_custom_call.1']
    #allocation13 [shape = 'u8[40960]{0}', space=vmem, size = 0xa000, scoped, tag = 'input window, operand 4, single buffered']
    #allocation14 [shape = 'u8[131072]{0}', space=vmem, size = 0x20000, scoped, tag = 'input window, operand 5, single buffered']
    #allocation15 [shape = 's32[1]{0}', space=sflag, size = 0x4, scoped, tag = 'scoped memory for tpu_custom_call.1']
    #allocation16 [shape = 'u8[20480]{0}', space=vmem, size = 0x5000, scoped, tag = 'output window, operand 0, single buffered']
    %11 = vsyncpa [#allocation6], 0
    %12 = vsyncpa [#allocation9], 0
    %13 = vsyncpa [#allocation12], 0
    %14 = vsyncpa [#allocation15], 0
    %15 = vsyncpa [#allocation7], 0
    // Predicated region
    $region2: #{tpu_custom_call.1} parent=1 // pred_check
      _
    $region3: #{tpu_custom_call.1} parent=1 // pred_check_branch
      %17 = sbr.rel (0) target = $region5
    $region4: #{tpu_custom_call.1} parent=1 // pred_region
      %s19 = ssub.s32 640, 640
      %20 = vsyncadd [#allocation6], %s19
      %s21 = sshll.u32 [#allocation5], 4
      %s22 = int_to_ptr.vmem [resolvable:$true] %s21
      %27 = dma.hbm_to_vmem [thread:$0]  %s0, 640, %s22, [#allocation6], 128, 128, 8
    $region5: #{tpu_custom_call.1} parent=1 // pred_fallthru
      _
    // Predicated region
    $region6: #{tpu_custom_call.1} parent=1 // pred_check
      _
    $region7: #{tpu_custom_call.1} parent=1 // pred_check_branch
      %29 = sbr.rel (0) target = $region9
    $region8: #{tpu_custom_call.1} parent=1 // pred_region
      %s31 = ssub.s32 512, 512
      %32 = vsyncadd [#allocation9], %s31
      %s33 = sshll.u32 [#allocation8], 4
      %s34 = int_to_ptr.vmem [resolvable:$true] %s33
      %39 = dma.hbm_to_vmem [thread:$0]  %s1, 512, %s34, [#allocation9], 128, 128, 8
    $region9: #{tpu_custom_call.1} parent=1 // pred_fallthru
      _
    // Predicated region
    $region10: #{tpu_custom_call.1} parent=1 // pred_check
      _
    $region11: #{tpu_custom_call.1} parent=1 // pred_check_branch
      %41 = sbr.rel (0) target = $region13
    $region12: #{tpu_custom_call.1} parent=1 // pred_region
      %s43 = ssub.s32 512, 512
      %44 = vsyncadd [#allocation9], %s43
      %s45 = sshll.u32 [#allocation10], 4
      %s46 = int_to_ptr.vmem [resolvable:$true] %s45
      %51 = dma.hbm_to_vmem [thread:$0]  %s2, 512, %s46, [#allocation9], 128, 128, 8
    $region13: #{tpu_custom_call.1} parent=1 // pred_fallthru
      _
    // Predicated region
    $region14: #{tpu_custom_call.1} parent=1 // pred_check
      _
    $region15: #{tpu_custom_call.1} parent=1 // pred_check_branch
      %53 = sbr.rel (0) target = $region17
    $region16: #{tpu_custom_call.1} parent=1 // pred_region
      %s55 = ssub.s32 16, 16
      %56 = vsyncadd [#allocation12], %s55
      %s58 = sshll.u32 [#allocation11], 4
      %s59 = int_to_ptr.vmem [resolvable:$true] %s58
      %61 = dma.hbm_to_vmem [thread:$0]  %s3, 16, %s59, [#allocation12]
    $region17: #{tpu_custom_call.1} parent=1 // pred_fallthru
      _
    // Predicated region
    $region18: #{tpu_custom_call.1} parent=1 // pred_check
      _
    $region19: #{tpu_custom_call.1} parent=1 // pred_check_branch
      %63 = sbr.rel (0) target = $region21
    $region20: #{tpu_custom_call.1} parent=1 // pred_region
      %s65 = ssub.s32 1280, 1280
      %66 = vsyncadd [#allocation12], %s65
      %s67 = sshll.u32 [#allocation13], 4
      %s68 = int_to_ptr.vmem [resolvable:$true] %s67
      %73 = dma.hbm_to_vmem [thread:$0]  %s4, 1280, %s68, [#allocation12], 256, 256, 16
    $region21: #{tpu_custom_call.1} parent=1 // pred_fallthru
      _
    // Predicated region
    $region22: #{tpu_custom_call.1} parent=1 // pred_check
      _
    $region23: #{tpu_custom_call.1} parent=1 // pred_check_branch
      %75 = sbr.rel (0) target = $region25
    $region24: #{tpu_custom_call.1} parent=1 // pred_region
      %s77 = ssub.s32 4096, 4096
      %78 = vsyncadd [#allocation15], %s77
      %s79 = sshll.u32 [#allocation14], 4
      %s80 = int_to_ptr.vmem [resolvable:$true] %s79
      %85 = dma.hbm_to_vmem [thread:$0]  %s5, 4096, %s80, [#allocation15], 128, 128, 8
    $region25: #{tpu_custom_call.1} parent=1 // pred_fallthru
      _
    // Predicated region
    $region26: #{tpu_custom_call.1} parent=1 // pred_check
      _
    $region27: #{tpu_custom_call.1} parent=1 // pred_check_branch
      %87 = sbr.rel (0) target = $region29
    $region28: #{tpu_custom_call.1} parent=1 // pred_region
      %88 = dma.done [#allocation6], 640
    $region29: #{tpu_custom_call.1} parent=1 // pred_fallthru
      _
    // Predicated region
    $region30: #{tpu_custom_call.1} parent=1 // pred_check
      _
    $region31: #{tpu_custom_call.1} parent=1 // pred_check_branch
      %90 = sbr.rel (0) target = $region33
    $region32: #{tpu_custom_call.1} parent=1 // pred_region
      %91 = dma.done [#allocation9], 512
    $region33: #{tpu_custom_call.1} parent=1 // pred_fallthru
      _
    // Predicated region
    $region34: #{tpu_custom_call.1} parent=1 // pred_check
      _
    $region35: #{tpu_custom_call.1} parent=1 // pred_check_branch
      %93 = sbr.rel (0) target = $region37
    $region36: #{tpu_custom_call.1} parent=1 // pred_region
      %94 = dma.done [#allocation9], 512
    $region37: #{tpu_custom_call.1} parent=1 // pred_fallthru
      _
    // Predicated region
    $region38: #{tpu_custom_call.1} parent=1 // pred_check
      _
    $region39: #{tpu_custom_call.1} parent=1 // pred_check_branch
      %96 = sbr.rel (0) target = $region41
    $region40: #{tpu_custom_call.1} parent=1 // pred_region
      %97 = dma.done [#allocation12], 16
    $region41: #{tpu_custom_call.1} parent=1 // pred_fallthru
      _
    // Predicated region
    $region42: #{tpu_custom_call.1} parent=1 // pred_check
      _
    $region43: #{tpu_custom_call.1} parent=1 // pred_check_branch
      %99 = sbr.rel (0) target = $region45
    $region44: #{tpu_custom_call.1} parent=1 // pred_region
      %100 = dma.done [#allocation12], 1280
    $region45: #{tpu_custom_call.1} parent=1 // pred_fallthru
      _
    // Predicated region
    $region46: #{tpu_custom_call.1} parent=1 // pred_check
      _
    $region47: #{tpu_custom_call.1} parent=1 // pred_check_branch
      %102 = sbr.rel (0) target = $region49
    $region48: #{tpu_custom_call.1} parent=1 // pred_region
      %103 = dma.done [#allocation15], 4096
    $region49: #{tpu_custom_call.1} parent=1 // pred_fallthru
      _
    %p104 = scmp.eq.s32.totalorder 0, 0
    // Predicated region
    $region50: #{tpu_custom_call.1} parent=1 // pred_check
      %p105 = pneg %p104
    $region51: #{tpu_custom_call.1} parent=1 // pred_check_branch
      %107 = sbr.rel (%p105) target = $region53
    $region52: #{tpu_custom_call.1} parent=1 // pred_region
      %vm108 = vcmask 7168
      %109 = vst.msk [vmem:[#allocation2] sm:$0xff] %vm108, -inf
      %110 = vst.msk [vmem:[#allocation2 + $0x8] sm:$0xff] %vm108, -inf
      %111 = vst.msk [vmem:[#allocation2 + $0x10] sm:$0xff] %vm108, -inf
      %112 = vst.msk [vmem:[#allocation2 + $0x18] sm:$0xff] %vm108, -inf
      %113 = vst.msk [vmem:[#allocation2 + $0x20] sm:$0xff] %vm108, -inf
      %114 = vst.msk [vmem:[#allocation3] sm:$0xff] %vm108, 0.0
      %115 = vst.msk [vmem:[#allocation3 + $0x8] sm:$0xff] %vm108, 0.0
      %116 = vst.msk [vmem:[#allocation3 + $0x10] sm:$0xff] %vm108, 0.0
      %117 = vst.msk [vmem:[#allocation3 + $0x18] sm:$0xff] %vm108, 0.0
      %118 = vst.msk [vmem:[#allocation3 + $0x20] sm:$0xff] %vm108, 0.0
      %vm119 = vcmask 64512
      %120 = vst.msk [vmem:[#allocation4] sm:$0xff] %vm119, 0.0
      %121 = vst.msk [vmem:[#allocation4 + $0x8] sm:$0xff] %vm119, 0.0
      %122 = vst.msk [vmem:[#allocation4 + $0x10] sm:$0xff] %vm119, 0.0
      %123 = vst.msk [vmem:[#allocation4 + $0x18] sm:$0xff] %vm119, 0.0
      %124 = vst.msk [vmem:[#allocation4 + $0x20] sm:$0xff] %vm119, 0.0
    $region53: #{tpu_custom_call.1} parent=1 // pred_fallthru
      _
    %v125 = vld [vmem:[#allocation5] sm:$0xff]
    %v126 = vld [vmem:[#allocation5 + $0x8] sm:$0xff]
    %v127 = vld [vmem:[#allocation5 + $0x10] sm:$0xff]
    %v128 = vld [vmem:[#allocation5 + $0x18] sm:$0xff]
    %v129 = vld [vmem:[#allocation5 + $0x20] sm:$0xff]
    %v130 = vld [vmem:[#allocation13] sm:$0xff]
    %v131 = vld [vmem:[#allocation13 + $0x8] sm:$0xff]
    %v132 = vld [vmem:[#allocation13 + $0x10] sm:$0xff]
    %v133 = vld [vmem:[#allocation13 + $0x18] sm:$0xff]
    %v134 = vld [vmem:[#allocation13 + $0x20] sm:$0xff]
    %v135 = vld [vmem:[#allocation13 + $0x28] sm:$0xff]
    %v136 = vld [vmem:[#allocation13 + $0x30] sm:$0xff]
    %v137 = vld [vmem:[#allocation13 + $0x38] sm:$0xff]
    %v138 = vld [vmem:[#allocation13 + $0x40] sm:$0xff]
    %v139 = vld [vmem:[#allocation13 + $0x48] sm:$0xff]
    %v140 = vld [vmem:[#allocation8] sm:$0xff]
    %v141 = vld [vmem:[#allocation8 + $0x8] sm:$0xff]
    %v142 = vld [vmem:[#allocation8 + $0x10] sm:$0xff]
    %v143 = vld [vmem:[#allocation8 + $0x18] sm:$0xff]
    %vm144 = vcmask 261120
    %v146 = vsel %vm144, %v125, 0
    %v149 = vsel %vm144, %v126, 0
    %v152 = vsel %vm144, %v127, 0
    %v155 = vsel %vm144, %v128, 0
    %v158 = vsel %vm144, %v129, 0
    %160 = vmatprep.subr.mxu0 0.0
    %161 = vmatpush1.msra.mxu0 %v140
    %162 = vmatprep.subr.mxu0 0.0
    %163 = vmatpush1.msra.mxu0 %v141
    %164 = vmatprep.subr.mxu0 0.0
    %165 = vmatpush1.msra.mxu0 %v142
    %166 = vmatprep.subr.mxu0 0.0
    %167 = vmatpush1.msra.mxu0 %v143
    %168 = vmatprep.subr.mxu0 0.0
    %169 = vmatpush1.msra.mxu0 0.0
    %170 = vmatprep.subr.mxu0 0.0
    %171 = vmatpush1.msra.mxu0 0.0
    %172 = vmatprep.subr.mxu0 0.0
    %173 = vmatpush1.msra.mxu0 0.0
    %174 = vmatprep.subr.mxu0 0.0
    %175 = vmatpush1.msra.mxu0 0.0
    %176 = vmatprep.subr.mxu0 0.0
    %177 = vmatpush1.msra.mxu0 0.0
    %178 = vmatprep.subr.mxu0 0.0
    %179 = vmatpush1.msra.mxu0 0.0
    %180 = vmatprep.subr.mxu0 0.0
    %181 = vmatpush1.msra.mxu0 0.0
    %182 = vmatprep.subr.mxu0 0.0
    %183 = vmatpush1.msra.mxu0 0.0
    %184 = vmatprep.subr.mxu0 0.0
    %185 = vmatpush1.msra.mxu0 0.0
    %186 = vmatprep.subr.mxu0 0.0
    %187 = vmatpush1.msra.mxu0 0.0
    %188 = vmatprep.subr.mxu0 0.0
    %189 = vmatpush1.msra.mxu0 0.0
    %190 = vmatprep.subr.mxu0 0.0
    %191 = vmatpush1.msra.mxu0 0.0
    %192 = vmatprep.subr.mxu0 0.0
    %193 = vmatpush1.msra.mxu0 0.0
    %194 = vmatprep.subr.mxu0 0.0
    %195 = vmatpush1.msra.mxu0 0.0
    %196 = vmatprep.subr.mxu0 0.0
    %197 = vmatpush1.msra.mxu0 0.0
    %198 = vmatprep.subr.mxu0 0.0
    %199 = vmatpush1.msra.mxu0 0.0
    %200 = vmatprep.subr.mxu0 0.0
    %201 = vmatpush1.msra.mxu0 0.0
    %202 = vmatprep.subr.mxu0 0.0
    %203 = vmatpush1.msra.mxu0 0.0
    %204 = vmatprep.subr.mxu0 0.0
    %205 = vmatpush1.msra.mxu0 0.0
    %206 = vmatprep.subr.mxu0 0.0
    %207 = vmatpush1.msra.mxu0 0.0
    %208 = vmatprep.subr.mxu0 0.0
    %209 = vmatpush1.msra.mxu0 0.0
    %210 = vmatprep.subr.mxu0 0.0
    %211 = vmatpush1.msra.mxu0 0.0
    %212 = vmatprep.subr.mxu0 0.0
    %213 = vmatpush1.msra.mxu0 0.0
    %214 = vmatprep.subr.mxu0 0.0
    %215 = vmatpush1.msra.mxu0 0.0
    %216 = vmatprep.subr.mxu0 0.0
    %217 = vmatpush1.msra.mxu0 0.0
    %218 = vmatprep.subr.mxu0 0.0
    %219 = vmatpush1.msra.mxu0 0.0
    %220 = vmatprep.subr.mxu0 0.0
    %221 = vmatpush1.msra.mxu0 0.0
    %222 = vmatprep.subr.mxu0 0.0
    %223 = vmatpush1.msra.mxu0 0.0
    %224 = vmatprep.mubr.f32.mxu0 0.0
    %225 = vmatmul.mubr.f32.gmra.mrb[0].mxu0 %v146
    %v226 = vpop.f32.mrb[0].mxu0
    %v227 = vadd.f32 0.0, %v226
    %v228 = vpop.f32.mrb[0].mxu0
    %229 = vmatprep.mubr.f32.mxu0 0.0
    %230 = vmatmul.mubr.f32.gmra.mrb[0].mxu0 %v149
    %v231 = vpop.f32.mrb[0].mxu0
    %v232 = vadd.f32 0.0, %v231
    %v233 = vpop.f32.mrb[0].mxu0
    %234 = vmatprep.mubr.f32.mxu0 0.0
    %235 = vmatmul.mubr.f32.gmra.mrb[0].mxu0 %v152
    %v236 = vpop.f32.mrb[0].mxu0
    %v237 = vadd.f32 0.0, %v236
    %v238 = vpop.f32.mrb[0].mxu0
    %239 = vmatprep.mubr.f32.mxu0 0.0
    %240 = vmatmul.mubr.f32.gmra.mrb[0].mxu0 %v155
    %v241 = vpop.f32.mrb[0].mxu0
    %v242 = vadd.f32 0.0, %v241
    %v243 = vpop.f32.mrb[0].mxu0
    %244 = vmatprep.mubr.f32.mxu0 0.0
    %245 = vmatmul.mubr.f32.gmra.mrb[0].mxu0 %v158
    %v246 = vpop.f32.mrb[0].mxu0
    %v247 = vadd.f32 0.0, %v246
    %v248 = vpop.f32.mrb[0].mxu0
    %249 = vdwg.mxu0
    %251 = vset.pattern.permute.xlu0 0
    %252 = vperm.xlu0 %251, %v227
    %v253 = vpop.permute.xlu0 %252
    %256 = vset.pattern.permute.xlu0 0
    %257 = vperm.xlu0 %256, %v232
    %v258 = vpop.permute.xlu0 %257
    %261 = vset.pattern.permute.xlu0 0
    %262 = vperm.xlu0 %261, %v237
    %v263 = vpop.permute.xlu0 %262
    %266 = vset.pattern.permute.xlu0 0
    %267 = vperm.xlu0 %266, %v242
    %v268 = vpop.permute.xlu0 %267
    %271 = vset.pattern.permute.xlu0 0
    %272 = vperm.xlu0 %271, %v247
    %v273 = vpop.permute.xlu0 %272
    %v275 = vadd.f32 %v253, %v130
    %v276 = vadd.f32 %v253, %v131
    %v277 = vadd.f32 %v258, %v132
    %v278 = vadd.f32 %v258, %v133
    %v279 = vadd.f32 %v263, %v134
    %v280 = vadd.f32 %v263, %v135
    %v281 = vadd.f32 %v268, %v136
    %v282 = vadd.f32 %v268, %v137
    %v283 = vadd.f32 %v273, %v138
    %v284 = vadd.f32 %v273, %v139
    %vm285 = vcmp.ge.f32.partialorder %v275, 0.0
    %vm286 = vcmp.ge.f32.partialorder %v276, 0.0
    %vm287 = vcmp.ge.f32.partialorder %v277, 0.0
    %vm288 = vcmp.ge.f32.partialorder %v278, 0.0
    %vm289 = vcmp.ge.f32.partialorder %v279, 0.0
    %vm290 = vcmp.ge.f32.partialorder %v280, 0.0
    %vm291 = vcmp.ge.f32.partialorder %v281, 0.0
    %vm292 = vcmp.ge.f32.partialorder %v282, 0.0
    %vm293 = vcmp.ge.f32.partialorder %v283, 0.0
    %vm294 = vcmp.ge.f32.partialorder %v284, 0.0
    %v295 = vmul.f32 %v275, 0.2
    %v296 = vmul.f32 %v276, 0.2
    %v297 = vmul.f32 %v277, 0.2
    %v298 = vmul.f32 %v278, 0.2
    %v299 = vmul.f32 %v279, 0.2
    %v300 = vmul.f32 %v280, 0.2
    %v301 = vmul.f32 %v281, 0.2
    %v302 = vmul.f32 %v282, 0.2
    %v303 = vmul.f32 %v283, 0.2
    %v304 = vmul.f32 %v284, 0.2
    %v305 = vsel %vm285, %v275, %v295
    %v306 = vsel %vm286, %v276, %v296
    %v307 = vsel %vm287, %v277, %v297
    %v308 = vsel %vm288, %v278, %v298
    %v309 = vsel %vm289, %v279, %v299
    %v310 = vsel %vm290, %v280, %v300
    %v311 = vsel %vm291, %v281, %v301
    %v312 = vsel %vm292, %v282, %v302
    %v313 = vsel %vm293, %v283, %v303
    %v314 = vsel %vm294, %v284, %v304
    %vm315 = vcmp.gt.f32.partialorder %v130, -5e+29
    %vm316 = vcmp.gt.f32.partialorder %v131, -5e+29
    %vm317 = vcmp.gt.f32.partialorder %v132, -5e+29
    %vm318 = vcmp.gt.f32.partialorder %v133, -5e+29
    %vm319 = vcmp.gt.f32.partialorder %v134, -5e+29
    %vm320 = vcmp.gt.f32.partialorder %v135, -5e+29
    %vm321 = vcmp.gt.f32.partialorder %v136, -5e+29
    %vm322 = vcmp.gt.f32.partialorder %v137, -5e+29
    %vm323 = vcmp.gt.f32.partialorder %v138, -5e+29
    %vm324 = vcmp.gt.f32.partialorder %v139, -5e+29
    %v325 = vsel %vm315, %v305, -1e+30
    %v326 = vsel %vm316, %v306, -1e+30
    %v327 = vsel %vm317, %v307, -1e+30
    %v328 = vsel %vm318, %v308, -1e+30
    %v329 = vsel %vm319, %v309, -1e+30
    %v330 = vsel %vm320, %v310, -1e+30
    %v331 = vsel %vm321, %v311, -1e+30
    %v332 = vsel %vm322, %v312, -1e+30
    %v333 = vsel %vm323, %v313, -1e+30
    %v334 = vsel %vm324, %v314, -1e+30
    %v335 = vld [vmem:[#allocation2] sm:$0xff]
    %v336 = vld [vmem:[#allocation2 + $0x8] sm:$0xff]
    %v337 = vld [vmem:[#allocation2 + $0x10] sm:$0xff]
    %v338 = vld [vmem:[#allocation2 + $0x18] sm:$0xff]
    %v339 = vld [vmem:[#allocation2 + $0x20] sm:$0xff]
    %v340 = vmax.f32 %v325, %v326
    %341 = vmax.xlane.f32.xlu0 %v340
    %v342 = vpop.xlane.xlu0 %341
    %v343 = vmax.f32 %v327, %v328
    %344 = vmax.xlane.f32.xlu0 %v343
    %v345 = vpop.xlane.xlu0 %344
    %v346 = vmax.f32 %v329, %v330
    %347 = vmax.xlane.f32.xlu0 %v346
    %v348 = vpop.xlane.xlu0 %347
    %v349 = vmax.f32 %v331, %v332
    %350 = vmax.xlane.f32.xlu0 %v349
    %v351 = vpop.xlane.xlu0 %350
    %v352 = vmax.f32 %v333, %v334
    %353 = vmax.xlane.f32.xlu0 %v352
    %v354 = vpop.xlane.xlu0 %353
    %v355 = vmax.f32 %v335, %v342
    %v356 = vmax.f32 %v336, %v345
    %v357 = vmax.f32 %v337, %v348
    %v358 = vmax.f32 %v338, %v351
    %v359 = vmax.f32 %v339, %v354
    %v360 = vsub.f32 %v335, %v355
    %v361 = vsub.f32 %v336, %v356
    %v362 = vsub.f32 %v337, %v357
    %v363 = vsub.f32 %v338, %v358
    %v364 = vsub.f32 %v339, %v359
    %v365 = vmul.f32 %v360, 1.442695
    %v366 = vpow.pop %v365
    %v367 = vmul.f32 %v361, 1.442695
    %v368 = vpow.pop %v367
    %v369 = vmul.f32 %v362, 1.442695
    %v370 = vpow.pop %v369
    %v371 = vmul.f32 %v363, 1.442695
    %v372 = vpow.pop %v371
    %v373 = vmul.f32 %v364, 1.442695
    %v374 = vpow.pop %v373
    %376 = vset.pattern.permute.xlu0 0
    %377 = vperm.xlu0 %376, %v355
    %v378 = vpop.permute.xlu0 %377
    %381 = vset.pattern.permute.xlu0 0
    %382 = vperm.xlu0 %381, %v356
    %v383 = vpop.permute.xlu0 %382
    %386 = vset.pattern.permute.xlu0 0
    %387 = vperm.xlu0 %386, %v357
    %v388 = vpop.permute.xlu0 %387
    %391 = vset.pattern.permute.xlu0 0
    %392 = vperm.xlu0 %391, %v358
    %v393 = vpop.permute.xlu0 %392
    %396 = vset.pattern.permute.xlu0 0
    %397 = vperm.xlu0 %396, %v359
    %v398 = vpop.permute.xlu0 %397
    %v400 = vsub.f32 %v325, %v378
    %v401 = vsub.f32 %v326, %v378
    %v402 = vsub.f32 %v327, %v383
    %v403 = vsub.f32 %v328, %v383
    %v404 = vsub.f32 %v329, %v388
    %v405 = vsub.f32 %v330, %v388
    %v406 = vsub.f32 %v331, %v393
    %v407 = vsub.f32 %v332, %v393
    %v408 = vsub.f32 %v333, %v398
    %v409 = vsub.f32 %v334, %v398
    %v410 = vmul.f32 %v400, 1.442695
    %v411 = vpow.pop %v410
    %v412 = vmul.f32 %v401, 1.442695
    %v413 = vpow.pop %v412
    %v414 = vmul.f32 %v402, 1.442695
    %v415 = vpow.pop %v414
    %v416 = vmul.f32 %v403, 1.442695
    %v417 = vpow.pop %v416
    %v418 = vmul.f32 %v404, 1.442695
    %v419 = vpow.pop %v418
    %v420 = vmul.f32 %v405, 1.442695
    %v421 = vpow.pop %v420
    %v422 = vmul.f32 %v406, 1.442695
    %v423 = vpow.pop %v422
    %v424 = vmul.f32 %v407, 1.442695
    %v425 = vpow.pop %v424
    %v426 = vmul.f32 %v408, 1.442695
    %v427 = vpow.pop %v426
    %v428 = vmul.f32 %v409, 1.442695
    %v429 = vpow.pop %v428
    %v430 = vsel %vm315, %v411, 0.0
    %v431 = vsel %vm316, %v413, 0.0
    %v432 = vsel %vm317, %v415, 0.0
    %v433 = vsel %vm318, %v417, 0.0
    %v434 = vsel %vm319, %v419, 0.0
    %v435 = vsel %vm320, %v421, 0.0
    %v436 = vsel %vm321, %v423, 0.0
    %v437 = vsel %vm322, %v425, 0.0
    %v438 = vsel %vm323, %v427, 0.0
    %v439 = vsel %vm324, %v429, 0.0
    %v440 = vld [vmem:[#allocation3] sm:$0xff]
    %v441 = vld [vmem:[#allocation3 + $0x8] sm:$0xff]
    %v442 = vld [vmem:[#allocation3 + $0x10] sm:$0xff]
    %v443 = vld [vmem:[#allocation3 + $0x18] sm:$0xff]
    %v444 = vld [vmem:[#allocation3 + $0x20] sm:$0xff]
    %v445 = vmul.f32 %v366, %v440
    %v446 = vmul.f32 %v368, %v441
    %v447 = vmul.f32 %v370, %v442
    %v448 = vmul.f32 %v372, %v443
    %v449 = vmul.f32 %v374, %v444
    %v450 = vadd.f32 %v430, %v431
    %451 = vadd.xlane.f32.xlu0 %v450
    %v452 = vpop.xlane.xlu0 %451
    %v453 = vadd.f32 %v432, %v433
    %454 = vadd.xlane.f32.xlu0 %v453
    %v455 = vpop.xlane.xlu0 %454
    %v456 = vadd.f32 %v434, %v435
    %457 = vadd.xlane.f32.xlu0 %v456
    %v458 = vpop.xlane.xlu0 %457
    %v459 = vadd.f32 %v436, %v437
    %460 = vadd.xlane.f32.xlu0 %v459
    %v461 = vpop.xlane.xlu0 %460
    %v462 = vadd.f32 %v438, %v439
    %463 = vadd.xlane.f32.xlu0 %v462
    %v464 = vpop.xlane.xlu0 %463
    %v465 = vadd.f32 %v445, %v452
    %v466 = vadd.f32 %v446, %v455
    %v467 = vadd.f32 %v447, %v458
    %v468 = vadd.f32 %v448, %v461
    %v469 = vadd.f32 %v449, %v464
    %vm470 = vcmask 7168
    %471 = vst.msk [vmem:[#allocation3] sm:$0xff] %vm470, %v465
    %472 = vst.msk [vmem:[#allocation3 + $0x8] sm:$0xff] %vm470, %v466
    %473 = vst.msk [vmem:[#allocation3 + $0x10] sm:$0xff] %vm470, %v467
    %474 = vst.msk [vmem:[#allocation3 + $0x18] sm:$0xff] %vm470, %v468
    %475 = vst.msk [vmem:[#allocation3 + $0x20] sm:$0xff] %vm470, %v469
    %v476 = vld [vmem:[#allocation4] sm:$0xff]
    %v477 = vld [vmem:[#allocation4 + $0x8] sm:$0xff]
    %v478 = vld [vmem:[#allocation4 + $0x10] sm:$0xff]
    %v479 = vld [vmem:[#allocation4 + $0x18] sm:$0xff]
    %v480 = vld [vmem:[#allocation4 + $0x20] sm:$0xff]
    %482 = vset.pattern.permute.xlu0 0
    %483 = vperm.xlu0 %482, %v366
    %v484 = vpop.permute.xlu0 %483
    %487 = vset.pattern.permute.xlu0 0
    %488 = vperm.xlu0 %487, %v368
    %v489 = vpop.permute.xlu0 %488
    %492 = vset.pattern.permute.xlu0 0
    %493 = vperm.xlu0 %492, %v370
    %v494 = vpop.permute.xlu0 %493
    %497 = vset.pattern.permute.xlu0 0
    %498 = vperm.xlu0 %497, %v372
    %v499 = vpop.permute.xlu0 %498
    %502 = vset.pattern.permute.xlu0 0
    %503 = vperm.xlu0 %502, %v374
    %v504 = vpop.permute.xlu0 %503
    %v506 = vmul.f32 %v484, %v476
    %v507 = vmul.f32 %v489, %v477
    %v508 = vmul.f32 %v494, %v478
    %v509 = vmul.f32 %v499, %v479
    %v510 = vmul.f32 %v504, %v480
    %v511 = vld [vmem:[#allocation14] sm:$0xff]
    %v512 = vld [vmem:[#allocation14 + $0x8] sm:$0xff]
    %v513 = vld [vmem:[#allocation14 + $0x10] sm:$0xff]
    %v514 = vld [vmem:[#allocation14 + $0x18] sm:$0xff]
    %v515 = vld [vmem:[#allocation14 + $0x20] sm:$0xff]
    %v516 = vld [vmem:[#allocation14 + $0x28] sm:$0xff]
    %v517 = vld [vmem:[#allocation14 + $0x30] sm:$0xff]
    %v518 = vld [vmem:[#allocation14 + $0x38] sm:$0xff]
    %v519 = vld [vmem:[#allocation14 + $0x40] sm:$0xff]
    %v520 = vld [vmem:[#allocation14 + $0x48] sm:$0xff]
    %v521 = vld [vmem:[#allocation14 + $0x50] sm:$0xff]
    %v522 = vld [vmem:[#allocation14 + $0x58] sm:$0xff]
    %v523 = vld [vmem:[#allocation14 + $0x60] sm:$0xff]
    %v524 = vld [vmem:[#allocation14 + $0x68] sm:$0xff]
    %v525 = vld [vmem:[#allocation14 + $0x70] sm:$0xff]
    %v526 = vld [vmem:[#allocation14 + $0x78] sm:$0xff]
    %v527 = vld [vmem:[#allocation14 + $0x80] sm:$0xff]
    %v528 = vld [vmem:[#allocation14 + $0x88] sm:$0xff]
    %v529 = vld [vmem:[#allocation14 + $0x90] sm:$0xff]
    %v530 = vld [vmem:[#allocation14 + $0x98] sm:$0xff]
    %v531 = vld [vmem:[#allocation14 + $0xa0] sm:$0xff]
    %v532 = vld [vmem:[#allocation14 + $0xa8] sm:$0xff]
    %v533 = vld [vmem:[#allocation14 + $0xb0] sm:$0xff]
    %v534 = vld [vmem:[#allocation14 + $0xb8] sm:$0xff]
    %v535 = vld [vmem:[#allocation14 + $0xc0] sm:$0xff]
    %v536 = vld [vmem:[#allocation14 + $0xc8] sm:$0xff]
    %v537 = vld [vmem:[#allocation14 + $0xd0] sm:$0xff]
    %v538 = vld [vmem:[#allocation14 + $0xd8] sm:$0xff]
    %v539 = vld [vmem:[#allocation14 + $0xe0] sm:$0xff]
    %v540 = vld [vmem:[#allocation14 + $0xe8] sm:$0xff]
    %v541 = vld [vmem:[#allocation14 + $0xf0] sm:$0xff]
    %v542 = vld [vmem:[#allocation14 + $0xf8] sm:$0xff]
    %543 = vmatprep.subr.mxu0 0.0
    %544 = vmatpush1.msra.mxu0 %v511
    %545 = vmatprep.subr.mxu0 0.0
    %546 = vmatpush1.msra.mxu0 %v512
    %547 = vmatprep.subr.mxu0 0.0
    %548 = vmatpush1.msra.mxu0 %v513
    %549 = vmatprep.subr.mxu0 0.0
    %550 = vmatpush1.msra.mxu0 %v514
    %551 = vmatprep.subr.mxu0 0.0
    %552 = vmatpush1.msra.mxu0 %v515
    %553 = vmatprep.subr.mxu0 0.0
    %554 = vmatpush1.msra.mxu0 %v516
    %555 = vmatprep.subr.mxu0 0.0
    %556 = vmatpush1.msra.mxu0 %v517
    %557 = vmatprep.subr.mxu0 0.0
    %558 = vmatpush1.msra.mxu0 %v518
    %559 = vmatprep.subr.mxu0 0.0
    %560 = vmatpush1.msra.mxu0 %v519
    %561 = vmatprep.subr.mxu0 0.0
    %562 = vmatpush1.msra.mxu0 %v520
    %563 = vmatprep.subr.mxu0 0.0
    %564 = vmatpush1.msra.mxu0 %v521
    %565 = vmatprep.subr.mxu0 0.0
    %566 = vmatpush1.msra.mxu0 %v522
    %567 = vmatprep.subr.mxu0 0.0
    %568 = vmatpush1.msra.mxu0 %v523
    %569 = vmatprep.subr.mxu0 0.0
    %570 = vmatpush1.msra.mxu0 %v524
    %571 = vmatprep.subr.mxu0 0.0
    %572 = vmatpush1.msra.mxu0 %v525
    %573 = vmatprep.subr.mxu0 0.0
    %574 = vmatpush1.msra.mxu0 %v526
    %575 = vmatprep.subr.mxu0 0.0
    %576 = vmatpush1.msra.mxu0 %v527
    %577 = vmatprep.subr.mxu0 0.0
    %578 = vmatpush1.msra.mxu0 %v528
    %579 = vmatprep.subr.mxu0 0.0
    %580 = vmatpush1.msra.mxu0 %v529
    %581 = vmatprep.subr.mxu0 0.0
    %582 = vmatpush1.msra.mxu0 %v530
    %583 = vmatprep.subr.mxu0 0.0
    %584 = vmatpush1.msra.mxu0 %v531
    %585 = vmatprep.subr.mxu0 0.0
    %586 = vmatpush1.msra.mxu0 %v532
    %587 = vmatprep.subr.mxu0 0.0
    %588 = vmatpush1.msra.mxu0 %v533
    %589 = vmatprep.subr.mxu0 0.0
    %590 = vmatpush1.msra.mxu0 %v534
    %591 = vmatprep.subr.mxu0 0.0
    %592 = vmatpush1.msra.mxu0 %v535
    %593 = vmatprep.subr.mxu0 0.0
    %594 = vmatpush1.msra.mxu0 %v536
    %595 = vmatprep.subr.mxu0 0.0
    %596 = vmatpush1.msra.mxu0 %v537
    %597 = vmatprep.subr.mxu0 0.0
    %598 = vmatpush1.msra.mxu0 %v538
    %599 = vmatprep.subr.mxu0 0.0
    %600 = vmatpush1.msra.mxu0 %v539
    %601 = vmatprep.subr.mxu0 0.0
    %602 = vmatpush1.msra.mxu0 %v540
    %603 = vmatprep.subr.mxu0 0.0
    %604 = vmatpush1.msra.mxu0 %v541
    %605 = vmatprep.subr.mxu0 0.0
    %606 = vmatpush1.msra.mxu0 %v542
    %607 = vmatprep.mubr.f32.mxu0 %v431
    %608 = vmatmul.mubr.f32.gmra.mrb[0].mxu0 %v430
    %v609 = vpop.f32.mrb[0].mxu0
    %v610 = vadd.f32 0.0, %v609
    %v611 = vpop.f32.mrb[0].mxu0
    %612 = vmatprep.mubr.f32.mxu0 %v433
    %613 = vmatmul.mubr.f32.gmra.mrb[0].mxu0 %v432
    %v614 = vpop.f32.mrb[0].mxu0
    %v615 = vadd.f32 0.0, %v614
    %v616 = vpop.f32.mrb[0].mxu0
    %617 = vmatprep.mubr.f32.mxu0 %v435
    %618 = vmatmul.mubr.f32.gmra.mrb[0].mxu0 %v434
    %v619 = vpop.f32.mrb[0].mxu0
    %v620 = vadd.f32 0.0, %v619
    %v621 = vpop.f32.mrb[0].mxu0
    %622 = vmatprep.mubr.f32.mxu0 %v437
    %623 = vmatmul.mubr.f32.gmra.mrb[0].mxu0 %v436
    %v624 = vpop.f32.mrb[0].mxu0
    %v625 = vadd.f32 0.0, %v624
    %v626 = vpop.f32.mrb[0].mxu0
    %627 = vmatprep.mubr.f32.mxu0 %v439
    %628 = vmatmul.mubr.f32.gmra.mrb[0].mxu0 %v438
    %v629 = vpop.f32.mrb[0].mxu0
    %v630 = vadd.f32 0.0, %v629
    %v631 = vpop.f32.mrb[0].mxu0
    %632 = vdwg.mxu0
    %v633 = vadd.f32 %v506, %v610
    %v634 = vadd.f32 %v507, %v615
    %v635 = vadd.f32 %v508, %v620
    %v636 = vadd.f32 %v509, %v625
    %v637 = vadd.f32 %v510, %v630
    %vm638 = vcmask 64512
    %639 = vst.msk [vmem:[#allocation4] sm:$0xff] %vm638, %v633
    %640 = vst.msk [vmem:[#allocation4 + $0x8] sm:$0xff] %vm638, %v634
    %641 = vst.msk [vmem:[#allocation4 + $0x10] sm:$0xff] %vm638, %v635
    %642 = vst.msk [vmem:[#allocation4 + $0x18] sm:$0xff] %vm638, %v636
    %643 = vst.msk [vmem:[#allocation4 + $0x20] sm:$0xff] %vm638, %v637
    %644 = vst.msk [vmem:[#allocation2] sm:$0xff] %vm470, %v355
    %645 = vst.msk [vmem:[#allocation2 + $0x8] sm:$0xff] %vm470, %v356
    %646 = vst.msk [vmem:[#allocation2 + $0x10] sm:$0xff] %vm470, %v357
    %647 = vst.msk [vmem:[#allocation2 + $0x18] sm:$0xff] %vm470, %v358
    %648 = vst.msk [vmem:[#allocation2 + $0x20] sm:$0xff] %vm470, %v359
    // Predicated region
    $region54: #{tpu_custom_call.1} parent=1 // pred_check
      %p649 = pneg %p104
    $region55: #{tpu_custom_call.1} parent=1 // pred_check_branch
      %651 = sbr.rel (%p649) target = $region57
    $region56: #{tpu_custom_call.1} parent=1 // pred_region
      %v652 = vld [vmem:[#allocation3] sm:$0xff]
      %v653 = vld [vmem:[#allocation3 + $0x8] sm:$0xff]
      %v654 = vld [vmem:[#allocation3 + $0x10] sm:$0xff]
      %v655 = vld [vmem:[#allocation3 + $0x18] sm:$0xff]
      %v656 = vld [vmem:[#allocation3 + $0x20] sm:$0xff]
      %v657 = vmax.f32 %v652, 1e-30
      %v658 = vmax.f32 %v653, 1e-30
      %v659 = vmax.f32 %v654, 1e-30
      %v660 = vmax.f32 %v655, 1e-30
      %v661 = vmax.f32 %v656, 1e-30
      %v662 = vrcp.pop %v657
      %v663 = vrcp.pop %v658
      %v664 = vrcp.pop %v659
      %v665 = vrcp.pop %v660
      %v666 = vrcp.pop %v661
      %v667 = vld [vmem:[#allocation4] sm:$0xff]
      %v668 = vld [vmem:[#allocation4 + $0x8] sm:$0xff]
      %v669 = vld [vmem:[#allocation4 + $0x10] sm:$0xff]
      %v670 = vld [vmem:[#allocation4 + $0x18] sm:$0xff]
      %v671 = vld [vmem:[#allocation4 + $0x20] sm:$0xff]
      %673 = vset.pattern.permute.xlu0 0
      %674 = vperm.xlu0 %673, %v662
      %v675 = vpop.permute.xlu0 %674
      %678 = vset.pattern.permute.xlu0 0
      %679 = vperm.xlu0 %678, %v663
      %v680 = vpop.permute.xlu0 %679
      %683 = vset.pattern.permute.xlu0 0
      %684 = vperm.xlu0 %683, %v664
      %v685 = vpop.permute.xlu0 %684
      %688 = vset.pattern.permute.xlu0 0
      %689 = vperm.xlu0 %688, %v665
      %v690 = vpop.permute.xlu0 %689
      %693 = vset.pattern.permute.xlu0 0
      %694 = vperm.xlu0 %693, %v666
      %v695 = vpop.permute.xlu0 %694
      %v697 = vmul.f32 %v667, %v675
      %v698 = vmul.f32 %v668, %v680
      %v699 = vmul.f32 %v669, %v685
      %v700 = vmul.f32 %v670, %v690
      %v701 = vmul.f32 %v671, %v695
      %v702 = vld [vmem:[#allocation10] sm:$0xff]
      %v703 = vld [vmem:[#allocation10 + $0x8] sm:$0xff]
      %v704 = vld [vmem:[#allocation10 + $0x10] sm:$0xff]
      %v705 = vld [vmem:[#allocation10 + $0x18] sm:$0xff]
      %v706 = vld [vmem:[#allocation11] sm:$0x1]
      %v708 = vlaneseq
      %v709 = vshrl.u32 %v708, 7
      %v710 = vsub.s32 0, %v709
      %v711 = vrot.slane %v706, %v710
      %713 = vmatprep.subr.mxu0 0.0
      %714 = vmatpush1.msra.mxu0 %v702
      %715 = vmatprep.subr.mxu0 0.0
      %716 = vmatpush1.msra.mxu0 %v703
      %717 = vmatprep.subr.mxu0 0.0
      %718 = vmatpush1.msra.mxu0 %v704
      %719 = vmatprep.subr.mxu0 0.0
      %720 = vmatpush1.msra.mxu0 %v705
      %721 = vmatprep.subr.mxu0 0.0
      %722 = vmatpush1.msra.mxu0 0.0
      %723 = vmatprep.subr.mxu0 0.0
      %724 = vmatpush1.msra.mxu0 0.0
      %725 = vmatprep.subr.mxu0 0.0
      %726 = vmatpush1.msra.mxu0 0.0
      %727 = vmatprep.subr.mxu0 0.0
      %728 = vmatpush1.msra.mxu0 0.0
      %729 = vmatprep.subr.mxu0 0.0
      %730 = vmatpush1.msra.mxu0 0.0
      %731 = vmatprep.subr.mxu0 0.0
      %732 = vmatpush1.msra.mxu0 0.0
      %733 = vmatprep.subr.mxu0 0.0
      %734 = vmatpush1.msra.mxu0 0.0
      %735 = vmatprep.subr.mxu0 0.0
      %736 = vmatpush1.msra.mxu0 0.0
      %737 = vmatprep.subr.mxu0 0.0
      %738 = vmatpush1.msra.mxu0 0.0
      %739 = vmatprep.subr.mxu0 0.0
      %740 = vmatpush1.msra.mxu0 0.0
      %741 = vmatprep.subr.mxu0 0.0
      %742 = vmatpush1.msra.mxu0 0.0
      %743 = vmatprep.subr.mxu0 0.0
      %744 = vmatpush1.msra.mxu0 0.0
      %745 = vmatprep.subr.mxu0 0.0
      %746 = vmatpush1.msra.mxu0 0.0
      %747 = vmatprep.subr.mxu0 0.0
      %748 = vmatpush1.msra.mxu0 0.0
      %749 = vmatprep.subr.mxu0 0.0
      %750 = vmatpush1.msra.mxu0 0.0
      %751 = vmatprep.subr.mxu0 0.0
      %752 = vmatpush1.msra.mxu0 0.0
      %753 = vmatprep.subr.mxu0 0.0
      %754 = vmatpush1.msra.mxu0 0.0
      %755 = vmatprep.subr.mxu0 0.0
      %756 = vmatpush1.msra.mxu0 0.0
      %757 = vmatprep.subr.mxu0 0.0
      %758 = vmatpush1.msra.mxu0 0.0
      %759 = vmatprep.subr.mxu0 0.0
      %760 = vmatpush1.msra.mxu0 0.0
      %761 = vmatprep.subr.mxu0 0.0
      %762 = vmatpush1.msra.mxu0 0.0
      %763 = vmatprep.subr.mxu0 0.0
      %764 = vmatpush1.msra.mxu0 0.0
      %765 = vmatprep.subr.mxu0 0.0
      %766 = vmatpush1.msra.mxu0 0.0
      %767 = vmatprep.subr.mxu0 0.0
      %768 = vmatpush1.msra.mxu0 0.0
      %769 = vmatprep.subr.mxu0 0.0
      %770 = vmatpush1.msra.mxu0 0.0
      %771 = vmatprep.subr.mxu0 0.0
      %772 = vmatpush1.msra.mxu0 0.0
      %773 = vmatprep.subr.mxu0 0.0
      %774 = vmatpush1.msra.mxu0 0.0
      %775 = vmatprep.subr.mxu0 0.0
      %776 = vmatpush1.msra.mxu0 0.0
      %777 = vmatprep.mubr.f32.mxu0 0.0
      %778 = vmatmul.mubr.f32.gmra.mrb[0].mxu0 %v146
      %v779 = vpop.f32.mrb[0].mxu0
      %v780 = vadd.f32 %v711, %v779
      %v781 = vpop.f32.mrb[0].mxu0
      %782 = vmatprep.mubr.f32.mxu0 0.0
      %783 = vmatmul.mubr.f32.gmra.mrb[0].mxu0 %v149
      %v784 = vpop.f32.mrb[0].mxu0
      %v785 = vadd.f32 %v711, %v784
      %v786 = vpop.f32.mrb[0].mxu0
      %787 = vmatprep.mubr.f32.mxu0 0.0
      %788 = vmatmul.mubr.f32.gmra.mrb[0].mxu0 %v152
      %v789 = vpop.f32.mrb[0].mxu0
      %v790 = vadd.f32 %v711, %v789
      %v791 = vpop.f32.mrb[0].mxu0
      %792 = vmatprep.mubr.f32.mxu0 0.0
      %793 = vmatmul.mubr.f32.gmra.mrb[0].mxu0 %v155
      %v794 = vpop.f32.mrb[0].mxu0
      %v795 = vadd.f32 %v711, %v794
      %v796 = vpop.f32.mrb[0].mxu0
      %797 = vmatprep.mubr.f32.mxu0 0.0
      %798 = vmatmul.mubr.f32.gmra.mrb[0].mxu0 %v158
      %v799 = vpop.f32.mrb[0].mxu0
      %v800 = vadd.f32 %v711, %v799
      %v801 = vpop.f32.mrb[0].mxu0
      %802 = vdwg.mxu0
      %v803 = vadd.f32 %v697, %v780
      %v804 = vadd.f32 %v698, %v785
      %v805 = vadd.f32 %v699, %v790
      %v806 = vadd.f32 %v700, %v795
      %v807 = vadd.f32 %v701, %v800
      %v808 = vmul.f32 %v803, %v803
      %v809 = vmul.f32 %v804, %v804
      %v810 = vmul.f32 %v805, %v805
      %v811 = vmul.f32 %v806, %v806
      %v812 = vmul.f32 %v807, %v807
      %v813 = vsel %vm638, %v808, 0.0
      %814 = vadd.xlane.f32.xlu0 %v813
      %v815 = vpop.xlane.xlu0 %814
      %v816 = vsel %vm638, %v809, 0.0
      %817 = vadd.xlane.f32.xlu0 %v816
      %v818 = vpop.xlane.xlu0 %817
      %v819 = vsel %vm638, %v810, 0.0
      %820 = vadd.xlane.f32.xlu0 %v819
      %v821 = vpop.xlane.xlu0 %820
      %v822 = vsel %vm638, %v811, 0.0
      %823 = vadd.xlane.f32.xlu0 %v822
      %v824 = vpop.xlane.xlu0 %823
      %v825 = vsel %vm638, %v812, 0.0
      %826 = vadd.xlane.f32.xlu0 %v825
      %v827 = vpop.xlane.xlu0 %826
      %v828 = vrsqrt.pop %v815
      %v829 = vmul.f32 %v815, %v828
      %vm830 = vcmp.eq.f32.partialorder %v815, inf
      %v831 = vsel %vm830, %v815, %v829
      %vm832 = vcmp.eq.f32.partialorder %v815, 0.0
      %v833 = vand.u32 %v815, 2147483648
      %v834 = vsel %vm832, %v833, %v831
      %v835 = vrsqrt.pop %v818
      %v836 = vmul.f32 %v818, %v835
      %vm837 = vcmp.eq.f32.partialorder %v818, inf
      %v838 = vsel %vm837, %v818, %v836
      %vm839 = vcmp.eq.f32.partialorder %v818, 0.0
      %v840 = vand.u32 %v818, 2147483648
      %v841 = vsel %vm839, %v840, %v838
      %v842 = vrsqrt.pop %v821
      %v843 = vmul.f32 %v821, %v842
      %vm844 = vcmp.eq.f32.partialorder %v821, inf
      %v845 = vsel %vm844, %v821, %v843
      %vm846 = vcmp.eq.f32.partialorder %v821, 0.0
      %v847 = vand.u32 %v821, 2147483648
      %v848 = vsel %vm846, %v847, %v845
      %v849 = vrsqrt.pop %v824
      %v850 = vmul.f32 %v824, %v849
      %vm851 = vcmp.eq.f32.partialorder %v824, inf
      %v852 = vsel %vm851, %v824, %v850
      %vm853 = vcmp.eq.f32.partialorder %v824, 0.0
      %v854 = vand.u32 %v824, 2147483648
      %v855 = vsel %vm853, %v854, %v852
      %v856 = vrsqrt.pop %v827
      %v857 = vmul.f32 %v827, %v856
      %vm858 = vcmp.eq.f32.partialorder %v827, inf
      %v859 = vsel %vm858, %v827, %v857
      %vm860 = vcmp.eq.f32.partialorder %v827, 0.0
      %v861 = vand.u32 %v827, 2147483648
      %v862 = vsel %vm860, %v861, %v859
      %v863 = vmax.f32 %v834, 1e-12
      %v864 = vmax.f32 %v841, 1e-12
      %v865 = vmax.f32 %v848, 1e-12
      %v866 = vmax.f32 %v855, 1e-12
      %v867 = vmax.f32 %v862, 1e-12
      %v868 = vrcp.pop %v863
      %v869 = vmul.f32 %v803, %v868
      %v870 = vrcp.pop %v864
      %v871 = vmul.f32 %v804, %v870
      %v872 = vrcp.pop %v865
      %v873 = vmul.f32 %v805, %v872
      %v874 = vrcp.pop %v866
      %v875 = vmul.f32 %v806, %v874
      %v876 = vrcp.pop %v867
      %v877 = vmul.f32 %v807, %v876
      %v878 = vsel %vm638, %v869, -inf
      %879 = vmax.xlane.f32.xlu0 %v878
      %v880 = vpop.xlane.xlu0 %879
      %v881 = vsel %vm638, %v871, -inf
      %882 = vmax.xlane.f32.xlu0 %v881
      %v883 = vpop.xlane.xlu0 %882
      %v884 = vsel %vm638, %v873, -inf
      %885 = vmax.xlane.f32.xlu0 %v884
      %v886 = vpop.xlane.xlu0 %885
      %v887 = vsel %vm638, %v875, -inf
      %888 = vmax.xlane.f32.xlu0 %v887
      %v889 = vpop.xlane.xlu0 %888
      %v890 = vsel %vm638, %v877, -inf
      %891 = vmax.xlane.f32.xlu0 %v890
      %v892 = vpop.xlane.xlu0 %891
      %v893 = vsub.f32 %v869, %v880
      %v894 = vsub.f32 %v871, %v883
      %v895 = vsub.f32 %v873, %v886
      %v896 = vsub.f32 %v875, %v889
      %v897 = vsub.f32 %v877, %v892
      %v898 = vmul.f32 %v893, 1.442695
      %v899 = vpow.pop %v898
      %v900 = vmul.f32 %v894, 1.442695
      %v901 = vpow.pop %v900
      %v902 = vmul.f32 %v895, 1.442695
      %v903 = vpow.pop %v902
      %v904 = vmul.f32 %v896, 1.442695
      %v905 = vpow.pop %v904
      %v906 = vmul.f32 %v897, 1.442695
      %v907 = vpow.pop %v906
      %v908 = vsel %vm638, %v899, 0.0
      %909 = vadd.xlane.f32.xlu0 %v908
      %v910 = vpop.xlane.xlu0 %909
      %v911 = vsel %vm638, %v901, 0.0
      %912 = vadd.xlane.f32.xlu0 %v911
      %v913 = vpop.xlane.xlu0 %912
      %v914 = vsel %vm638, %v903, 0.0
      %915 = vadd.xlane.f32.xlu0 %v914
      %v916 = vpop.xlane.xlu0 %915
      %v917 = vsel %vm638, %v905, 0.0
      %918 = vadd.xlane.f32.xlu0 %v917
      %v919 = vpop.xlane.xlu0 %918
      %v920 = vsel %vm638, %v907, 0.0
      %921 = vadd.xlane.f32.xlu0 %v920
      %v922 = vpop.xlane.xlu0 %921
      %v923 = vrcp.pop %v910
      %v924 = vmul.f32 %v899, %v923
      %v925 = vrcp.pop %v913
      %v926 = vmul.f32 %v901, %v925
      %v927 = vrcp.pop %v916
      %v928 = vmul.f32 %v903, %v927
      %v929 = vrcp.pop %v919
      %v930 = vmul.f32 %v905, %v929
      %v931 = vrcp.pop %v922
      %v932 = vmul.f32 %v907, %v931
      %933 = vst.msk [vmem:[#allocation16] sm:$0xff] %vm638, %v924
      %934 = vst.msk [vmem:[#allocation16 + $0x8] sm:$0xff] %vm638, %v926
      %935 = vst.msk [vmem:[#allocation16 + $0x10] sm:$0xff] %vm638, %v928
      %936 = vst.msk [vmem:[#allocation16 + $0x18] sm:$0xff] %vm638, %v930
      %937 = vst.msk [vmem:[#allocation16 + $0x20] sm:$0xff] %vm638, %v932
    $region57: #{tpu_custom_call.1} parent=1 // pred_fallthru
      _
    // Predicated region
    $region58: #{tpu_custom_call.1} parent=1 // pred_check
      _
    $region59: #{tpu_custom_call.1} parent=1 // pred_check_branch
      %939 = sbr.rel (0) target = $region61
    $region60: #{tpu_custom_call.1} parent=1 // pred_region
      %s941 = ssub.s32 640, 640
      %942 = vsyncadd [#allocation7], %s941
      %s943 = sshll.u32 [#allocation16], 4
      %s944 = int_to_ptr.vmem [resolvable:$true] %s943
      %949 = dma.vmem_to_hbm [thread:$0]  %s944, 640, %s6, [#allocation7], 128, 128, 8
    $region61: #{tpu_custom_call.1} parent=1 // pred_fallthru
      _
    // Predicated region
    $region62: #{tpu_custom_call.1} parent=1 // pred_check
      _
    $region63: #{tpu_custom_call.1} parent=1 // pred_check_branch
      %951 = sbr.rel (0) target = $region65
    $region64: #{tpu_custom_call.1} parent=1 // pred_region
      %952 = dma.done [#allocation7], 640
    $region65: #{tpu_custom_call.1} parent=1 // pred_fallthru
      _
    %953 = vsyncpa [#allocation6], 1
    %954 = vsyncpa [#allocation9], 1
    %955 = vsyncpa [#allocation12], 1
    %956 = vsyncpa [#allocation15], 1
    %957 = vsyncpa [#allocation7], 1

</llo_original>
